<compile_context>
chip_gen: v7x
topology: tpu7x:2x2x1
jax: 0.10.0
libtpu: 0.0.40
codegen_flags: <defaults>
</compile_context>

<pallas_src>
import jax
import jax.numpy as jnp
from jax.experimental import pallas as pl
from jax.experimental.pallas import tpu as pltpu


def _round_up(v, m):
    return ((v + m - 1) // m) * m


def mlp_kernel(p_ref, x_ref, o_ref):
    # p_ref: [24, 128] packed params (grid-invariant, DMA'd once)
    # x_ref: [8, tn]   features x batch-tile (batch on the 128-lane axis)
    # o_ref: [1, tn]   single real output row (sublane-minimal, lane-dense)
    x = x_ref[...]

    w1 = p_ref[0:8, 0:8]        # zero-padded 8x8 (real 6x8)
    b1 = p_ref[0:8, 8:9]
    w2 = p_ref[8:16, 0:8]       # zero-padded 8x8 (real 4x6)
    b2 = p_ref[8:16, 8:9]
    w3 = p_ref[16:17, 0:8]      # only the real output row (1x8, real 1x4)
    b3 = p_ref[16:17, 8:9]

    # Padded rows of h1/h2 are sigmoid(0)=0.5 but are multiplied by the zero
    # columns of the next packed weight matrix, so they never contribute.
    h1 = jax.nn.sigmoid(jnp.dot(w1, x, preferred_element_type=jnp.float32) + b1)
    h2 = jax.nn.sigmoid(jnp.dot(w2, h1, preferred_element_type=jnp.float32) + b2)
    o_ref[...] = jax.nn.sigmoid(
        jnp.dot(w3, h2, preferred_element_type=jnp.float32) + b3
    )


def pack_params(w1, b1, w2, b2, w3, b3):
    """Pack all weights/biases into one zero-padded f32 [24, 128] slab.

    Layout (rows 8-aligned, bias in column 8, EVERYTHING ELSE MUST BE ZERO —
    the zero padding is what makes the padded activation rows inert):
       rows  0: 8, cols 0:8 = W1^T,  col 8 = b1
       rows  8:16, cols 0:8 = W2^T,  col 8 = b2
       rows 16:24, cols 0:8 = W3^T,  col 8 = b3
    Call this ONCE and reuse the slab across forward calls.
    """
    p = jnp.zeros((24, 128), jnp.float32)
    p = p.at[0:6, 0:8].set(w1.T)     # [6, 8]
    p = p.at[0:6, 8].set(b1)         # [6]
    p = p.at[8:12, 0:6].set(w2.T)    # [4, 6]
    p = p.at[8:12, 8].set(b2)        # [4]
    p = p.at[16:17, 0:4].set(w3.T)   # [1, 4]
    p = p.at[16:17, 8].set(b3)       # [1]
    return p


def _choose_tile(n_pad, block_n):
    """Pick the batch (lane) tile size.

    Largest tile <= block_n, but for large N keep >= ~16 grid steps so the
    'parallel' axis feeds both v7x TensorCores; never shrink below 16K lanes
    (per-step pipeline overhead ~0.35 us dominates small tiles) or 128.
    """
    block_n = max(128, _round_up(block_n, 128))
    tn = min(block_n, n_pad)
    balanced = _round_up(-(-n_pad // 16), 128)   # cdiv(n_pad, 16) -> 128 mult
    tn = min(tn, max(16384, balanced))
    return max(128, min(tn, n_pad))


def mlp_forward(x, params, *, block_n=32768):
    n = x.shape[0]
    assert x.shape[1] == 8, "model expects 8 input features"

    n_pad = _round_up(n, 128)            # pad only to a 128 multiple
    tn = _choose_tile(n_pad, block_n)
    grid_n = pl.cdiv(n_pad, tn)          # ragged last block handled by masking

    # Feature-major layout: batch on lanes. (See TODO at top of file.)
    x_t = jnp.pad(x.astype(jnp.float32).T, ((0, 0), (0, n_pad - n)))  # [8, n_pad]

    out_t = pl.pallas_call(
        mlp_kernel,
        out_shape=jax.ShapeDtypeStruct((1, n_pad), jnp.float32),
        grid=(grid_n,),
        in_specs=[
            pl.BlockSpec((24, 128), lambda i: (0, 0)),   # grid-invariant params
            pl.BlockSpec((8, tn), lambda i: (0, i)),     # batch tile on lanes
        ],
        out_specs=pl.BlockSpec((1, tn), lambda i: (0, i)),  # lane-dense, 1 row
        compiler_params=pltpu.CompilerParams(
            dimension_semantics=("parallel",),
        ),
        cost_estimate=pl.CostEstimate(
            flops=(2 * 8 * 8 + 2 * 8 * 8 + 2 * 1 * 8) * n_pad,  # padded compute
            transcendentals=(8 + 8 + 1) * n_pad,
            bytes_accessed=(8 + 1) * 4 * n_pad + 24 * 128 * 4,
        ),
    )(params, x_t)

    # Restore the [N, 1] layout expected by the PyTorch module.
    return out_t[:, :n].T


def init_linear(key, fan_in, fan_out):
    # Deterministic init mimicking torch.nn.Linear's U(-1/sqrt(fan_in), 1/sqrt(fan_in)).
    kw, kb = jax.random.split(key)
    bound = 1.0 / jnp.sqrt(jnp.float32(fan_in))
    w = jax.random.uniform(kw, (fan_in, fan_out), jnp.float32, -bound, bound)
    b = jax.random.uniform(kb, (fan_out,), jnp.float32, -bound, bound)
    return w, b


if __name__ == "__main__":
    key = jax.random.PRNGKey(0)
    kx, k1, k2, k3 = jax.random.split(key, 4)

    N = 300  # not a multiple of 128: exercises lane padding + ragged blocks
    x = jax.random.normal(kx, (N, 8), jnp.float32)

    w1, b1 = init_linear(k1, 8, 6)
    w2, b2 = init_linear(k2, 6, 4)
    w3, b3 = init_linear(k3, 4, 1)

    # Pack once; reused across calls (hoisted out of the per-call path).
    params = pack_params(w1, b1, w2, b2, w3, b3)

    # Pure-JAX reference (same semantics as the PyTorch module).
    ref = jax.nn.sigmoid(x @ w1 + b1)
    ref = jax.nn.sigmoid(ref @ w2 + b2)
    ref = jax.nn.sigmoid(ref @ w3 + b3)

    # 1) Small tile -> grid=(2,) with a ragged last block (cdiv masking path).
    out_a = jax.block_until_ready(mlp_forward(x, params, block_n=256))
    # 2) Default large-tile path -> single block covering the whole batch.
    out_b = jax.block_until_ready(mlp_forward(x, params))

    assert out_a.shape == (N, 1), out_a.shape
    assert out_b.shape == (N, 1), out_b.shape
    assert jnp.allclose(out_a, ref, atol=3e-5), float(jnp.max(jnp.abs(out_a - ref)))
    assert jnp.allclose(out_b, ref, atol=3e-5), float(jnp.max(jnp.abs(out_b - ref)))
    print("KERNEL_OK")
</pallas_src>

<mosaic_0001>
module attributes {stable_mosaic.version = 11 : i64} {
  func.func @mlp_kernel(%arg0: i32, %arg1: memref<24x128xf32, #tpu.memory_space<vmem>>, %arg2: memref<8x256xf32, #tpu.memory_space<vmem>>, %arg3: memref<1x256xf32, #tpu.memory_space<vmem>>) attributes {dimension_semantics = [#tpu.dimension_semantics<parallel>], iteration_bounds = array<i64: 2>, scalar_prefetch = 0 : i64, scratch_operands = 0 : i64, tpu.core_type = #tpu.core_type<tc>, window_params = [{pipeline_mode = #tpu.pipeline_mode<synchronous>, transform_indices = @transform_0, window_bounds = array<i64: 24, 128>}, {transform_indices = @transform_1, window_bounds = array<i64: 8, 256>}, {transform_indices = @transform_2, window_bounds = array<i64: 1, 256>}]} {
    %c0 = arith.constant 0 : index
    %c0_0 = arith.constant 0 : index
    %0 = vector.load %arg2[%c0, %c0_0] : memref<8x256xf32, #tpu.memory_space<vmem>>, vector<8x256xf32>
    %c0_1 = arith.constant 0 : index
    %c0_2 = arith.constant 0 : index
    %1 = vector.load %arg1[%c0_1, %c0_2] : memref<24x128xf32, #tpu.memory_space<vmem>>, vector<8x8xf32>
    %c0_3 = arith.constant 0 : index
    %c8 = arith.constant 8 : index
    %2 = vector.load %arg1[%c0_3, %c8] : memref<24x128xf32, #tpu.memory_space<vmem>>, vector<8x1xf32>
    %c8_4 = arith.constant 8 : index
    %c0_5 = arith.constant 0 : index
    %3 = vector.load %arg1[%c8_4, %c0_5] : memref<24x128xf32, #tpu.memory_space<vmem>>, vector<8x8xf32>
    %c8_6 = arith.constant 8 : index
    %c8_7 = arith.constant 8 : index
    %4 = vector.load %arg1[%c8_6, %c8_7] : memref<24x128xf32, #tpu.memory_space<vmem>>, vector<8x1xf32>
    %c16 = arith.constant 16 : index
    %c0_8 = arith.constant 0 : index
    %5 = vector.load %arg1[%c16, %c0_8] : memref<24x128xf32, #tpu.memory_space<vmem>>, vector<1x8xf32>
    %c16_9 = arith.constant 16 : index
    %c8_10 = arith.constant 8 : index
    %6 = vector.load %arg1[%c16_9, %c8_10] : memref<24x128xf32, #tpu.memory_space<vmem>>, vector<1x1xf32>
    %cst = arith.constant dense<0.000000e+00> : vector<8x256xf32>
    %7 = tpu.matmul %1, %0, %cst {dimension_numbers = #tpu.dot_dimension_numbers<[1], [0], [0], [1], [0, 0, 1, 1], [], []>} : vector<8x8xf32>, vector<8x256xf32>, vector<8x256xf32> -> vector<8x256xf32>
    %8 = vector.broadcast %2 : vector<8x1xf32> to vector<8x256xf32>
    %9 = arith.addf %7, %8 : vector<8x256xf32>
    %10 = arith.negf %9 : vector<8x256xf32>
    %11 = math.exp %10 : vector<8x256xf32>
    %cst_11 = arith.constant 1.000000e+00 : f32
    %12 = vector.broadcast %cst_11 : f32 to vector<8x256xf32>
    %13 = arith.addf %12, %11 : vector<8x256xf32>
    %14 = arith.divf %12, %13 : vector<8x256xf32>
    %cst_12 = arith.constant dense<0.000000e+00> : vector<8x256xf32>
    %15 = tpu.matmul %3, %14, %cst_12 {dimension_numbers = #tpu.dot_dimension_numbers<[1], [0], [0], [1], [0, 0, 1, 1], [], []>} : vector<8x8xf32>, vector<8x256xf32>, vector<8x256xf32> -> vector<8x256xf32>
    %16 = vector.broadcast %4 : vector<8x1xf32> to vector<8x256xf32>
    %17 = arith.addf %15, %16 : vector<8x256xf32>
    %18 = arith.negf %17 : vector<8x256xf32>
    %19 = math.exp %18 : vector<8x256xf32>
    %cst_13 = arith.constant 1.000000e+00 : f32
    %20 = vector.broadcast %cst_13 : f32 to vector<8x256xf32>
    %21 = arith.addf %20, %19 : vector<8x256xf32>
    %22 = arith.divf %20, %21 : vector<8x256xf32>
    %cst_14 = arith.constant dense<0.000000e+00> : vector<1x256xf32>
    %23 = tpu.matmul %5, %22, %cst_14 {dimension_numbers = #tpu.dot_dimension_numbers<[1], [0], [0], [1], [0, 0, 1, 1], [], []>} : vector<1x8xf32>, vector<8x256xf32>, vector<1x256xf32> -> vector<1x256xf32>
    %24 = vector.broadcast %6 : vector<1x1xf32> to vector<1x256xf32>
    %25 = arith.addf %23, %24 : vector<1x256xf32>
    %26 = arith.negf %25 : vector<1x256xf32>
    %27 = math.exp %26 : vector<1x256xf32>
    %cst_15 = arith.constant 1.000000e+00 : f32
    %28 = vector.broadcast %cst_15 : f32 to vector<1x256xf32>
    %29 = arith.addf %28, %27 : vector<1x256xf32>
    %30 = arith.divf %28, %29 : vector<1x256xf32>
    %c0_16 = arith.constant 0 : index
    %c0_17 = arith.constant 0 : index
    %31 = vector.load %arg3[%c0_16, %c0_17] : memref<1x256xf32, #tpu.memory_space<vmem>>, vector<1x256xf32>
    tpu.vector_store %arg3[%c0_16, %c0_17], %30 {strides = array<i32>} : memref<1x256xf32, #tpu.memory_space<vmem>>, vector<1x256xf32>,
    return
  }
  func.func @transform_0(%arg0: i32) -> (i32, i32) {
    %c0_i32 = arith.constant 0 : i32
    %c0_i32_0 = arith.constant 0 : i32
    %c0_i32_1 = arith.constant 0 : i32
    return %c0_i32, %c0_i32_0 : i32, i32
  }
  func.func @transform_1(%arg0: i32) -> (i32, i32) {
    %c0_i32 = arith.constant 0 : i32
    %c0_i32_0 = arith.constant 0 : i32
    return %c0_i32, %arg0 : i32, i32
  }
  func.func @transform_2(%arg0: i32) -> (i32, i32) {
    %c0_i32 = arith.constant 0 : i32
    %c0_i32_0 = arith.constant 0 : i32
    return %c0_i32, %arg0 : i32, i32
  }
}

</mosaic_0001>

<llo_original>
// kernel: tpu_custom_call.1
$region0: #{tpu_custom_call.1}
  #allocation0 [shape = 'u32[]', space=smem, size = 0x4, offset = 0x4, fixed_abs, tag = 'smem constant byte address 0x4 - core index']
  #allocation1 [shape = 'u32[144,128]{1,0:T(1,128)}', space=vmem, size = 0x12000, scoped, tag = 'internal scratch']
  %s0 = inlined_call_operand.hbm [shape: f32[24,128], index: 0, kind: input, shape index: {}]
  %s1 = inlined_call_operand.hbm [shape: f32[8,384], index: 1, kind: input, shape index: {}]
  %s2 = inlined_call_operand.hbm [shape: f32[1,384], index: 2, kind: output, shape index: {}]
  %s3 = sld [smem:[#allocation0]]
  $region49: #{tpu_custom_call.1} parent=0
    _
  %s5 = ssub.s32 1, %s3
  %s6 = scalar_select 0, %s5, %s3
  $region1: #{tpu_custom_call.1} parent=0
    #allocation2 [shape = 'u8[12288]{0}', space=vmem, size = 0x3000, scoped, tag = 'input window, operand 0, single buffered']
    #allocation3 [shape = 's32[2]{0}', space=sflag, size = 0x8, scoped, tag = 'scoped memory for tpu_custom_call.1']
    #allocation4 [shape = 's32[2]{0}', space=sflag, size = 0x8, scoped, tag = 'scoped memory for tpu_custom_call.1']
    #allocation5 [shape = 'u8[16384]{0}', space=vmem, size = 0x4000, scoped, tag = 'input window, operand 1']
    #allocation6 [shape = 's32[2]{0}', space=sflag, size = 0x8, scoped, tag = 'scoped memory for tpu_custom_call.1']
    #allocation7 [shape = 'u8[2048]{0}', space=vmem, size = 0x800, scoped, tag = 'output window, operand 0']
    %7 = vsyncpa [#allocation3], 0
    %8 = vsyncpa [#allocation6], 0
    %s9 = scalar_lea.sflag [#allocation6], 1
    %10 = vsyncpa %s9, 0
    %11 = vsyncpa [#allocation4], 0
    %s12 = scalar_lea.sflag [#allocation4], 1
    %13 = vsyncpa %s12, 0
    loop: start=0, step=1, limit=4
    $region2: #{tpu_custom_call.1} parent=1 // loop_pre_header
      _
    $region3: #{tpu_custom_call.1} parent=1 // loop_header
      %s15 = sphi 0, %s19
      %p16 = scmp.ge.s32.totalorder %s15, 4
      %s23 = sphi 0, %s23
      %s25 = sphi 0, %s23
      %s26 = sphi 0, %s25
      %s40 = sphi 0, %s26
      %s46 = sphi 0, %s48
      %s49 = sphi 0, %s46
      %s50 = sphi 0, %s49
      %s66 = sphi 0, %s50
      %s72 = sphi 0, %s74
      %s75 = sphi 0, %s72
      %s76 = sphi 0, %s75
      %s92 = sphi 0, %s76
    $region4: #{tpu_custom_call.1} parent=1 // loop_header_branch
      %18 = sbr.rel (%p16) target = $region8
    $region5: #{tpu_custom_call.1} parent=1 // loop_body
      %s20 = ssub.s32 %s15, 1
      %s21 = ssub.s32 %s15, 2
      %s22 = sadd.s32 %s15, 1
      %s24 = sadd.s32 %s23, 1
      %p27 = scmp.eq.s32.totalorder %s15, 1
      %p28 = scmp.ne.s32.totalorder %s23, %s25
      %p29 = scmp.eq.s32.totalorder %s15, 0
      %p30 = por %p28, %p29
      %p31 = scmp.ne.s32.totalorder %s23, %s25
      %p32 = scmp.eq.s32.totalorder %s20, 1
      %p33 = por %p31, %p32
      %p34 = scmp.ne.s32.totalorder %s25, %s26
      %p35 = scmp.eq.s32.totalorder %s20, 0
      %p36 = por %p34, %p35
      %p37 = scmp.ne.s32.totalorder %s25, %s26
      %p38 = scmp.eq.s32.totalorder %s21, 1
      %p39 = por %p37, %p38
      %p41 = scmp.ne.s32.totalorder %s26, %s40
      %p42 = scmp.eq.s32.totalorder %s21, 0
      %p43 = por %p41, %p42
      %s44 = ssub.s32 %s15, %s22
      %p45 = scmp.eq.s32.totalorder %s44, 0
      %s47 = sadd.s32 %s46, 1
      %s48 = scalar_select %p45, %s46, %s47
      %p51 = pneg %p45
      %p52 = scmp.eq.s32.totalorder %s15, 1
      %p53 = por %p51, %p52
      %p54 = scmp.ne.s32.totalorder %s46, %s49
      %p55 = scmp.eq.s32.totalorder %s15, 0
      %p56 = por %p54, %p55
      %p57 = scmp.ne.s32.totalorder %s46, %s49
      %p58 = scmp.eq.s32.totalorder %s20, 1
      %p59 = por %p57, %p58
      %p60 = scmp.ne.s32.totalorder %s49, %s50
      %p61 = scmp.eq.s32.totalorder %s20, 0
      %p62 = por %p60, %p61
      %p63 = scmp.ne.s32.totalorder %s49, %s50
      %p64 = scmp.eq.s32.totalorder %s21, 1
      %p65 = por %p63, %p64
      %p67 = scmp.ne.s32.totalorder %s50, %s66
      %p68 = scmp.eq.s32.totalorder %s21, 0
      %p69 = por %p67, %p68
      %s70 = ssub.s32 %s15, %s22
      %p71 = scmp.eq.s32.totalorder %s70, 0
      %s73 = sadd.s32 %s72, 1
      %s74 = scalar_select %p71, %s72, %s73
      %p77 = pneg %p71
      %p78 = scmp.eq.s32.totalorder %s15, 1
      %p79 = por %p77, %p78
      %p80 = scmp.ne.s32.totalorder %s72, %s75
      %p81 = scmp.eq.s32.totalorder %s15, 0
      %p82 = por %p80, %p81
      %p83 = scmp.ne.s32.totalorder %s72, %s75
      %p84 = scmp.eq.s32.totalorder %s20, 1
      %p85 = por %p83, %p84
      %p86 = scmp.ne.s32.totalorder %s75, %s76
      %p87 = scmp.eq.s32.totalorder %s20, 0
      %p88 = por %p86, %p87
      %p89 = scmp.ne.s32.totalorder %s75, %s76
      %p90 = scmp.eq.s32.totalorder %s21, 1
      %p91 = por %p89, %p90
      %p93 = scmp.ne.s32.totalorder %s76, %s92
      %p94 = scmp.eq.s32.totalorder %s21, 0
      %p95 = por %p93, %p94
      %p96 = scmp.le.s32.totalorder 1, %s15
      %p97 = scmp.lt.s32.totalorder %s15, 3
      %p98 = pnand %p96, %p97
      %p99 = pneg %p98
      // Predicated region
      $region9: #{tpu_custom_call.1} parent=5 // pred_check
        _
      $region10: #{tpu_custom_call.1} parent=5 // pred_check_branch
        %101 = sbr.rel (%p98) target = $region12
      $region11: #{tpu_custom_call.1} parent=5 // pred_region
        %s102 = ssub.s32 %s15, 1
        // Predicated region
        $region13: #{tpu_custom_call.1} parent=11 // pred_check
          %p103 = pneg %p36
        $region14: #{tpu_custom_call.1} parent=11 // pred_check_branch
          %105 = sbr.rel (%p103) target = $region16
        $region15: #{tpu_custom_call.1} parent=11 // pred_region
          %s107 = ssub.s32 384, 384
          %108 = vsyncadd [#allocation3], %s107
          %s109 = sshll.u32 [#allocation2], 4
          %s110 = int_to_ptr.vmem [resolvable:$true] %s109
          %115 = dma.hbm_to_vmem [thread:$0]  %s0, 384, %s110, [#allocation3], 128, 128, 8
        $region16: #{tpu_custom_call.1} parent=11 // pred_fallthru
          _
      $region12: #{tpu_custom_call.1} parent=5 // pred_fallthru
        _
      %p116 = scmp.lt.s32.totalorder %s15, 2
      // Predicated region
      $region17: #{tpu_custom_call.1} parent=5 // pred_check
        %p117 = pneg %p116
      $region18: #{tpu_custom_call.1} parent=5 // pred_check_branch
        %119 = sbr.rel (%p117) target = $region20
      $region19: #{tpu_custom_call.1} parent=5 // pred_region
        // Predicated region
        $region21: #{tpu_custom_call.1} parent=19 // pred_check
          %p120 = pneg %p56
        $region22: #{tpu_custom_call.1} parent=19 // pred_check_branch
          %122 = sbr.rel (%p120) target = $region24
        $region23: #{tpu_custom_call.1} parent=19 // pred_region
          %s123 = sand.u32 %s46, 1
          %s124 = scalar_lea.sflag [#allocation6], %s123
          %s125 = sand.u32 %s46, 1
          %s126 = smul.addr %s125, 16
          %s127 = scalar_lea.vmem [#allocation5], %s126
          %s128 = smul.u32 2, %s15
          %s129 = ssub.s32 3, %s128
          %p130 = scmp.lt.s32.totalorder %s129, 2
          %s131 = scalar_select %p130, %s129, 2
          %s132 = smul.u32 128, %s131
          %s134 = ssub.s32 256, %s132
          %135 = vsyncadd %s124, %s134
          %p136 = scmp.ne.s32.totalorder 0, %s132
          %s137 = smul.addr %s128, 128
          %s138 = scalar_lea.hbm %s1, %s137
          %s139 = smul.u32 %s131, 8
          %s140 = sshll.u32 %s139, 4
          %s141 = sshll.u32 %s127, 4
          %s142 = int_to_ptr.vmem [resolvable:$true] %s141
          %144 = dma.hbm_to_vmem [thread:$0]  (%p136), %s138, %s140, %s142, %s124
        $region24: #{tpu_custom_call.1} parent=19 // pred_fallthru
          _
      $region20: #{tpu_custom_call.1} parent=5 // pred_fallthru
        _
      %p145 = scmp.le.s32.totalorder 1, %s15
      %p146 = scmp.lt.s32.totalorder %s15, 3
      %p147 = pnand %p145, %p146
      %p148 = pneg %p147
      // Predicated region
      $region25: #{tpu_custom_call.1} parent=5 // pred_check
        _
      $region26: #{tpu_custom_call.1} parent=5 // pred_check_branch
        %150 = sbr.rel (%p147) target = $region28
      $region27: #{tpu_custom_call.1} parent=5 // pred_region
        %s151 = ssub.s32 %s15, 1
        // Predicated region
        $region29: #{tpu_custom_call.1} parent=27 // pred_check
          %p152 = pneg %p36
        $region30: #{tpu_custom_call.1} parent=27 // pred_check_branch
          %154 = sbr.rel (%p152) target = $region32
        $region31: #{tpu_custom_call.1} parent=27 // pred_region
          %155 = dma.done [#allocation3], 384
        $region32: #{tpu_custom_call.1} parent=27 // pred_fallthru
          _
        %s156 = sand.u32 %s49, 1
        %s157 = scalar_lea.sflag [#allocation6], %s156
        %s158 = sand.u32 %s49, 1
        %s159 = smul.addr %s158, 16
        %s160 = scalar_lea.vmem [#allocation5], %s159
        // Predicated region
        $region33: #{tpu_custom_call.1} parent=27 // pred_check
          %p161 = pneg %p62
        $region34: #{tpu_custom_call.1} parent=27 // pred_check_branch
          %163 = sbr.rel (%p161) target = $region36
        $region35: #{tpu_custom_call.1} parent=27 // pred_region
          %164 = dma.done %s157, 256
        $region36: #{tpu_custom_call.1} parent=27 // pred_fallthru
          _
        %p165 = pneg %p36
        %p166 = pneg %p33
        %s167 = sand.u32 %s49, 1
        %s168 = scalar_lea.sflag [#allocation6], %s167
        %s169 = sand.u32 %s49, 1
        %s170 = smul.addr %s169, 16
        %s171 = scalar_lea.vmem [#allocation5], %s170
        %p172 = pneg %p62
        %p173 = pneg %p59
        %p174 = pneg %p88
        %p175 = pneg %p85
        %s176 = sand.u32 %s75, 1
        %s177 = scalar_lea.sflag [#allocation4], %s176
        %s178 = sand.u32 %s75, 1
        %s179 = smul.addr %s178, 2
        %s180 = scalar_lea.vmem [#allocation7], %s179
        %s181 = smul.u32 2, %s20
        %s182 = ssub.s32 3, %s181
        %p183 = scmp.lt.s32.totalorder %s182, 2
        %s184 = scalar_select %p183, %s182, 2
        %s185 = smul.u32 128, %s184
        %s186 = smul.u32 2, %s20
        %s187 = ssub.s32 3, %s186
        %p188 = scmp.lt.s32.totalorder %s187, 2
        %s189 = scalar_select %p188, %s187, 2
        %s190 = smul.u32 16, %s189
        %v191 = vld [vmem:[%s160] sm:$0xff]
        %v192 = vld [vmem:[%s160 + $0x8] sm:$0xff]
        %v193 = vld [vmem:[#allocation2] sm:$0xff]
        %v194 = vld [vmem:[#allocation2 + $0x8] sm:$0xff]
        %v195 = vld [vmem:[#allocation2 + $0x10] sm:$0x1]
        %197 = vset.pattern.permute.xlu0 8
        %198 = vperm.xlu0 %197, %v193
        %v199 = vpop.permute.xlu0 %198
        %vm201 = vcmask 64512
        %v202 = vsel %vm201, %v193, 0
        %204 = vmatprep.subr.mxu0 %v192
        %205 = vmatpush1.msra.mxu0 %v191
        %206 = vmatprep.subr.mxu0 0.0
        %207 = vmatpush1.msra.mxu0 0.0
        %208 = vmatprep.subr.mxu0 0.0
        %209 = vmatpush1.msra.mxu0 0.0
        %210 = vmatprep.subr.mxu0 0.0
        %211 = vmatpush1.msra.mxu0 0.0
        %212 = vmatprep.subr.mxu0 0.0
        %213 = vmatpush1.msra.mxu0 0.0
        %214 = vmatprep.subr.mxu0 0.0
        %215 = vmatpush1.msra.mxu0 0.0
        %216 = vmatprep.subr.mxu0 0.0
        %217 = vmatpush1.msra.mxu0 0.0
        %218 = vmatprep.subr.mxu0 0.0
        %219 = vmatpush1.msra.mxu0 0.0
        %220 = vmatprep.subr.mxu0 0.0
        %221 = vmatpush1.msra.mxu0 0.0
        %222 = vmatprep.subr.mxu0 0.0
        %223 = vmatpush1.msra.mxu0 0.0
        %224 = vmatprep.subr.mxu0 0.0
        %225 = vmatpush1.msra.mxu0 0.0
        %226 = vmatprep.subr.mxu0 0.0
        %227 = vmatpush1.msra.mxu0 0.0
        %228 = vmatprep.subr.mxu0 0.0
        %229 = vmatpush1.msra.mxu0 0.0
        %230 = vmatprep.subr.mxu0 0.0
        %231 = vmatpush1.msra.mxu0 0.0
        %232 = vmatprep.subr.mxu0 0.0
        %233 = vmatpush1.msra.mxu0 0.0
        %234 = vmatprep.subr.mxu0 0.0
        %235 = vmatpush1.msra.mxu0 0.0
        %236 = vmatprep.subr.mxu0 0.0
        %237 = vmatpush1.msra.mxu0 0.0
        %238 = vmatprep.subr.mxu0 0.0
        %239 = vmatpush1.msra.mxu0 0.0
        %240 = vmatprep.subr.mxu0 0.0
        %241 = vmatpush1.msra.mxu0 0.0
        %242 = vmatprep.subr.mxu0 0.0
        %243 = vmatpush1.msra.mxu0 0.0
        %244 = vmatprep.subr.mxu0 0.0
        %245 = vmatpush1.msra.mxu0 0.0
        %246 = vmatprep.subr.mxu0 0.0
        %247 = vmatpush1.msra.mxu0 0.0
        %248 = vmatprep.subr.mxu0 0.0
        %249 = vmatpush1.msra.mxu0 0.0
        %250 = vmatprep.subr.mxu0 0.0
        %251 = vmatpush1.msra.mxu0 0.0
        %252 = vmatprep.subr.mxu0 0.0
        %253 = vmatpush1.msra.mxu0 0.0
        %254 = vmatprep.subr.mxu0 0.0
        %255 = vmatpush1.msra.mxu0 0.0
        %256 = vmatprep.subr.mxu0 0.0
        %257 = vmatpush1.msra.mxu0 0.0
        %258 = vmatprep.subr.mxu0 0.0
        %259 = vmatpush1.msra.mxu0 0.0
        %260 = vmatprep.subr.mxu0 0.0
        %261 = vmatpush1.msra.mxu0 0.0
        %262 = vmatprep.subr.mxu0 0.0
        %263 = vmatpush1.msra.mxu0 0.0
        %264 = vmatprep.subr.mxu0 0.0
        %265 = vmatpush1.msra.mxu0 0.0
        %266 = vmatprep.subr.mxu0 0.0
        %267 = vmatpush1.msra.mxu0 0.0
        %268 = vmatprep.mubr.f32.mxu0 0.0
        %269 = vmatmul.mubr.f32.gmra.mrb[0].mxu0 %v202
        %v270 = vpop.f32.mrb[0].mxu0
        %v271 = vadd.f32 %v199, %v270
        %v272 = vpop.f32.mrb[0].mxu0
        %v273 = vadd.f32 %v199, %v272
        %274 = vdwg.mxu0
        %v275 = vxor.u32 %v271, 2147483648
        %v276 = vxor.u32 %v273, 2147483648
        %v277 = vmul.f32 %v275, 1.442695
        %v278 = vpow.pop %v277
        %v279 = vmul.f32 %v276, 1.442695
        %v280 = vpow.pop %v279
        %v281 = vadd.f32 %v278, 1.0
        %v282 = vadd.f32 %v280, 1.0
        %v283 = vrcp.pop %v281
        %v284 = vmul.f32 1.0, %v283
        %v285 = vrcp.pop %v282
        %v286 = vmul.f32 1.0, %v285
        %288 = vset.pattern.permute.xlu0 8
        %289 = vperm.xlu0 %288, %v194
        %v290 = vpop.permute.xlu0 %289
        %v292 = vsel %vm201, %v194, 0
        %294 = vmatprep.subr.mxu0 %v286
        %295 = vmatpush1.msra.mxu0 %v284
        %296 = vmatprep.subr.mxu0 0.0
        %297 = vmatpush1.msra.mxu0 0.0
        %298 = vmatprep.subr.mxu0 0.0
        %299 = vmatpush1.msra.mxu0 0.0
        %300 = vmatprep.subr.mxu0 0.0
        %301 = vmatpush1.msra.mxu0 0.0
        %302 = vmatprep.subr.mxu0 0.0
        %303 = vmatpush1.msra.mxu0 0.0
        %304 = vmatprep.subr.mxu0 0.0
        %305 = vmatpush1.msra.mxu0 0.0
        %306 = vmatprep.subr.mxu0 0.0
        %307 = vmatpush1.msra.mxu0 0.0
        %308 = vmatprep.subr.mxu0 0.0
        %309 = vmatpush1.msra.mxu0 0.0
        %310 = vmatprep.subr.mxu0 0.0
        %311 = vmatpush1.msra.mxu0 0.0
        %312 = vmatprep.subr.mxu0 0.0
        %313 = vmatpush1.msra.mxu0 0.0
        %314 = vmatprep.subr.mxu0 0.0
        %315 = vmatpush1.msra.mxu0 0.0
        %316 = vmatprep.subr.mxu0 0.0
        %317 = vmatpush1.msra.mxu0 0.0
        %318 = vmatprep.subr.mxu0 0.0
        %319 = vmatpush1.msra.mxu0 0.0
        %320 = vmatprep.subr.mxu0 0.0
        %321 = vmatpush1.msra.mxu0 0.0
        %322 = vmatprep.subr.mxu0 0.0
        %323 = vmatpush1.msra.mxu0 0.0
        %324 = vmatprep.subr.mxu0 0.0
        %325 = vmatpush1.msra.mxu0 0.0
        %326 = vmatprep.subr.mxu0 0.0
        %327 = vmatpush1.msra.mxu0 0.0
        %328 = vmatprep.subr.mxu0 0.0
        %329 = vmatpush1.msra.mxu0 0.0
        %330 = vmatprep.subr.mxu0 0.0
        %331 = vmatpush1.msra.mxu0 0.0
        %332 = vmatprep.subr.mxu0 0.0
        %333 = vmatpush1.msra.mxu0 0.0
        %334 = vmatprep.subr.mxu0 0.0
        %335 = vmatpush1.msra.mxu0 0.0
        %336 = vmatprep.subr.mxu0 0.0
        %337 = vmatpush1.msra.mxu0 0.0
        %338 = vmatprep.subr.mxu0 0.0
        %339 = vmatpush1.msra.mxu0 0.0
        %340 = vmatprep.subr.mxu0 0.0
        %341 = vmatpush1.msra.mxu0 0.0
        %342 = vmatprep.subr.mxu0 0.0
        %343 = vmatpush1.msra.mxu0 0.0
        %344 = vmatprep.subr.mxu0 0.0
        %345 = vmatpush1.msra.mxu0 0.0
        %346 = vmatprep.subr.mxu0 0.0
        %347 = vmatpush1.msra.mxu0 0.0
        %348 = vmatprep.subr.mxu0 0.0
        %349 = vmatpush1.msra.mxu0 0.0
        %350 = vmatprep.subr.mxu0 0.0
        %351 = vmatpush1.msra.mxu0 0.0
        %352 = vmatprep.subr.mxu0 0.0
        %353 = vmatpush1.msra.mxu0 0.0
        %354 = vmatprep.subr.mxu0 0.0
        %355 = vmatpush1.msra.mxu0 0.0
        %356 = vmatprep.subr.mxu0 0.0
        %357 = vmatpush1.msra.mxu0 0.0
        %358 = vmatprep.mubr.f32.mxu0 0.0
        %359 = vmatmul.mubr.f32.gmra.mrb[0].mxu0 %v292
        %v360 = vpop.f32.mrb[0].mxu0
        %v361 = vadd.f32 %v290, %v360
        %v362 = vpop.f32.mrb[0].mxu0
        %v363 = vadd.f32 %v290, %v362
        %364 = vdwg.mxu0
        %v365 = vxor.u32 %v361, 2147483648
        %v366 = vxor.u32 %v363, 2147483648
        %v367 = vmul.f32 %v365, 1.442695
        %v368 = vpow.pop %v367
        %v369 = vmul.f32 %v366, 1.442695
        %v370 = vpow.pop %v369
        %v371 = vadd.f32 %v368, 1.0
        %v372 = vadd.f32 %v370, 1.0
        %v373 = vrcp.pop %v371
        %v374 = vmul.f32 1.0, %v373
        %v375 = vrcp.pop %v372
        %v376 = vmul.f32 1.0, %v375
        %378 = vset.pattern.permute.xlu0 8
        %379 = vperm.xlu0 %378, %v195
        %v380 = vpop.permute.xlu0 %379
        %v382 = vsel %vm201, %v195, 0
        %384 = vmatprep.subr.mxu0 %v376
        %385 = vmatpush1.msra.mxu0 %v374
        %386 = vmatprep.subr.mxu0 0.0
        %387 = vmatpush1.msra.mxu0 0.0
        %388 = vmatprep.subr.mxu0 0.0
        %389 = vmatpush1.msra.mxu0 0.0
        %390 = vmatprep.subr.mxu0 0.0
        %391 = vmatpush1.msra.mxu0 0.0
        %392 = vmatprep.subr.mxu0 0.0
        %393 = vmatpush1.msra.mxu0 0.0
        %394 = vmatprep.subr.mxu0 0.0
        %395 = vmatpush1.msra.mxu0 0.0
        %396 = vmatprep.subr.mxu0 0.0
        %397 = vmatpush1.msra.mxu0 0.0
        %398 = vmatprep.subr.mxu0 0.0
        %399 = vmatpush1.msra.mxu0 0.0
        %400 = vmatprep.subr.mxu0 0.0
        %401 = vmatpush1.msra.mxu0 0.0
        %402 = vmatprep.subr.mxu0 0.0
        %403 = vmatpush1.msra.mxu0 0.0
        %404 = vmatprep.subr.mxu0 0.0
        %405 = vmatpush1.msra.mxu0 0.0
        %406 = vmatprep.subr.mxu0 0.0
        %407 = vmatpush1.msra.mxu0 0.0
        %408 = vmatprep.subr.mxu0 0.0
        %409 = vmatpush1.msra.mxu0 0.0
        %410 = vmatprep.subr.mxu0 0.0
        %411 = vmatpush1.msra.mxu0 0.0
        %412 = vmatprep.subr.mxu0 0.0
        %413 = vmatpush1.msra.mxu0 0.0
        %414 = vmatprep.subr.mxu0 0.0
        %415 = vmatpush1.msra.mxu0 0.0
        %416 = vmatprep.subr.mxu0 0.0
        %417 = vmatpush1.msra.mxu0 0.0
        %418 = vmatprep.subr.mxu0 0.0
        %419 = vmatpush1.msra.mxu0 0.0
        %420 = vmatprep.subr.mxu0 0.0
        %421 = vmatpush1.msra.mxu0 0.0
        %422 = vmatprep.subr.mxu0 0.0
        %423 = vmatpush1.msra.mxu0 0.0
        %424 = vmatprep.subr.mxu0 0.0
        %425 = vmatpush1.msra.mxu0 0.0
        %426 = vmatprep.subr.mxu0 0.0
        %427 = vmatpush1.msra.mxu0 0.0
        %428 = vmatprep.subr.mxu0 0.0
        %429 = vmatpush1.msra.mxu0 0.0
        %430 = vmatprep.subr.mxu0 0.0
        %431 = vmatpush1.msra.mxu0 0.0
        %432 = vmatprep.subr.mxu0 0.0
        %433 = vmatpush1.msra.mxu0 0.0
        %434 = vmatprep.subr.mxu0 0.0
        %435 = vmatpush1.msra.mxu0 0.0
        %436 = vmatprep.subr.mxu0 0.0
        %437 = vmatpush1.msra.mxu0 0.0
        %438 = vmatprep.subr.mxu0 0.0
        %439 = vmatpush1.msra.mxu0 0.0
        %440 = vmatprep.subr.mxu0 0.0
        %441 = vmatpush1.msra.mxu0 0.0
        %442 = vmatprep.subr.mxu0 0.0
        %443 = vmatpush1.msra.mxu0 0.0
        %444 = vmatprep.subr.mxu0 0.0
        %445 = vmatpush1.msra.mxu0 0.0
        %446 = vmatprep.subr.mxu0 0.0
        %447 = vmatpush1.msra.mxu0 0.0
        %448 = vmatprep.mubr.f32.mxu0 0.0
        %449 = vmatmul.mubr.f32.gmra.mrb[0].mxu0 %v382
        %v450 = vpop.f32.mrb[0].mxu0
        %v451 = vadd.f32 %v380, %v450
        %v452 = vpop.f32.mrb[0].mxu0
        %v453 = vadd.f32 %v380, %v452
        %454 = vdwg.mxu0
        %v455 = vxor.u32 %v451, 2147483648
        %v456 = vxor.u32 %v453, 2147483648
        %v457 = vmul.f32 %v455, 1.442695
        %v458 = vpow.pop %v457
        %v459 = vmul.f32 %v456, 1.442695
        %v460 = vpow.pop %v459
        %v461 = vadd.f32 %v458, 1.0
        %v462 = vadd.f32 %v460, 1.0
        %v463 = vrcp.pop %v461
        %v464 = vmul.f32 1.0, %v463
        %v465 = vrcp.pop %v462
        %v466 = vmul.f32 1.0, %v465
        %v469 = vcombine.low %v464, %v466
        %v471 = vunpack.c.l.s4 1966171168
        %v472 = vunpack.c.0.s8 %v471
        %v473 = vlaneseq
        %v474 = vshrl.u32 %v473, 7
        %v475 = vsub.s32 %v472, %v474
        %v476 = vrot.slane %v469, %v475
        %v478 = vunpack.c.l.s4 1966171168
        %v479 = vunpack.c.0.s8 %v478
        %v480 = vlaneseq
        %v481 = vshrl.u32 %v480, 7
        %v482 = vsub.s32 %v479, %v481
        %v483 = vrot.slane %v476, %v482
        %v485 = vlaneseq
        %vm486 = vcmp.ge.s32.totalorder %v485, 0
        %vm487 = vcmp.lt.s32.totalorder %v485, 256
        %vm488 = vmand %vm486, %vm487
        %489 = vst.msk [vmem:[%s180] sm:$0x3] %vm488, %v483
        %s490 = sand.u32 %s75, 1
        %s491 = scalar_lea.sflag [#allocation4], %s490
        %s492 = sand.u32 %s75, 1
        %s493 = smul.addr %s492, 2
        %s494 = scalar_lea.vmem [#allocation7], %s493
        // Predicated region
        $region37: #{tpu_custom_call.1} parent=27 // pred_check
          %p495 = pneg %p85
        $region38: #{tpu_custom_call.1} parent=27 // pred_check_branch
          %497 = sbr.rel (%p495) target = $region40
        $region39: #{tpu_custom_call.1} parent=27 // pred_region
          %s498 = smul.u32 2, %s20
          %s499 = ssub.s32 3, %s498
          %p500 = scmp.lt.s32.totalorder %s499, 2
          %s501 = scalar_select %p500, %s499, 2
          %s502 = smul.u32 16, %s501
          %s504 = ssub.s32 32, %s502
          %505 = vsyncadd %s491, %s504
          %p506 = scmp.ne.s32.totalorder 0, %s502
          %s507 = smul.addr %s498, 16
          %s508 = scalar_lea.hbm %s2, %s507
          %s509 = sshll.u32 %s501, 4
          %s510 = sshll.u32 %s494, 4
          %s511 = int_to_ptr.vmem [resolvable:$true] %s510
          %513 = dma.vmem_to_hbm [thread:$0]  (%p506), %s511, %s509, %s508, %s491
        $region40: #{tpu_custom_call.1} parent=27 // pred_fallthru
          _
      $region28: #{tpu_custom_call.1} parent=5 // pred_fallthru
        _
      %p514 = scmp.le.s32.totalorder 2, %s15
      // Predicated region
      $region41: #{tpu_custom_call.1} parent=5 // pred_check
        %p515 = pneg %p514
      $region42: #{tpu_custom_call.1} parent=5 // pred_check_branch
        %517 = sbr.rel (%p515) target = $region44
      $region43: #{tpu_custom_call.1} parent=5 // pred_region
        %s518 = ssub.s32 %s15, 2
        // Predicated region
        $region45: #{tpu_custom_call.1} parent=43 // pred_check
          %p519 = pneg %p91
        $region46: #{tpu_custom_call.1} parent=43 // pred_check_branch
          %521 = sbr.rel (%p519) target = $region48
        $region47: #{tpu_custom_call.1} parent=43 // pred_region
          %s522 = sand.u32 %s76, 1
          %s523 = scalar_lea.sflag [#allocation4], %s522
          %s524 = sand.u32 %s76, 1
          %s525 = smul.addr %s524, 2
          %s526 = scalar_lea.vmem [#allocation7], %s525
          %527 = dma.done %s523, 32
        $region48: #{tpu_custom_call.1} parent=43 // pred_fallthru
          _
      $region44: #{tpu_custom_call.1} parent=5 // pred_fallthru
        _
    $region6: #{tpu_custom_call.1} parent=1 // loop_footer
      %s19 = sadd.s32 1, %s15
    $region7: #{tpu_custom_call.1} parent=1 // loop_footer_branch
      %14 = sbr.rel target = $region3
    $region8: #{tpu_custom_call.1} parent=1 // loop_exit
      _
    %528 = vsyncpa [#allocation3], 1
    %s529 = scalar_lea.sflag [#allocation3], 1
    %530 = vsyncpa %s529, 1
    %531 = vsyncpa [#allocation6], 1
    %s532 = scalar_lea.sflag [#allocation6], 1
    %533 = vsyncpa %s532, 1
    %534 = vsyncpa [#allocation4], 1
    %s535 = scalar_lea.sflag [#allocation4], 1
    %536 = vsyncpa %s535, 1

</llo_original>
